<compile_context>
chip_gen: v7x
topology: tpu7x:2x2x1
jax: 0.10.0
libtpu: 0.0.40
codegen_flags: <defaults>
</compile_context>

<pallas_src>
import functools

import jax
import jax.numpy as jnp
from jax.experimental import pallas as pl
from jax.experimental.pallas import tpu as pltpu

LANE = 128
SUBLANE = 8


def _round_up(n, m):
    return (n + m - 1) // m * m


def _vae_kernel(
    x_ref, eps_ref,
    w1_ref, b1_ref, w2_ref, b2_ref,
    wh_ref, bh_ref,
    wd1_ref, bd1_ref, wd2_ref, bd2_ref, wd3_ref, bd3_ref,
    out_ref,
    *, input_pad, latent_pad,
):
    bf16 = jnp.bfloat16

    def mm(a, w_ref):
        # MXU in bf16 (native on v5e/v6e/v7x), accumulate in f32.
        return jnp.dot(a.astype(bf16), w_ref[...], preferred_element_type=jnp.float32)

    x = x_ref[...]

    # ---- encoder: Linear -> ReLU -> Linear -> ReLU (elementwise stays f32) ----
    h = jnp.maximum(mm(x, w1_ref) + b1_ref[...], 0.0)
    h = jnp.maximum(mm(h, w2_ref) + b2_ref[...], 0.0)

    # ---- fused mu|logvar head: ONE matmul, split at a 128-aligned column ----
    head = mm(h, wh_ref) + bh_ref[...]
    mu = head[:, :latent_pad]
    logvar = head[:, latent_pad:]

    # ---- reparameterize: z = mu + eps * exp(0.5 * logvar) ----
    # Padded z columns only ever hit zero rows of wd1, so padding cannot leak.
    z = mu + eps_ref[...] * jnp.exp(0.5 * logvar)

    # ---- decoder: Linear -> ReLU -> Linear -> ReLU -> Linear -> Sigmoid ----
    d = jnp.maximum(mm(z, wd1_ref) + bd1_ref[...], 0.0)
    d = jnp.maximum(mm(d, wd2_ref) + bd2_ref[...], 0.0)
    recon = jax.nn.sigmoid(mm(d, wd3_ref) + bd3_ref[...])

    # ---- lane-dense output slab: [recon | mu | logvar], two unmasked stores ----
    out_ref[:, :input_pad] = recon
    out_ref[:, input_pad:] = head          # mu|logvar in one 2*latent_pad-wide store


@jax.jit
def vae_forward(x, eps, pparams):
    """Fused VAE forward pass.

    x:       [B, input_dim] float32
    eps:     [B, latent_dim] float32 (the torch.randn_like noise, made explicit)
    pparams: LANE-padded params from pad_params(): bf16 weights [in_pad, out_pad],
             f32 biases [1, out_pad], mu/logvar head fused into wh/bh.
    Returns (recon [B, input_dim], mu [B, latent_dim], logvar [B, latent_dim]).
    """
    B, input_dim = x.shape
    latent_dim = eps.shape[1]

    ip = pparams["w1"].shape[0]      # padded input dim
    hp = pparams["w1"].shape[1]      # padded hidden dim
    lp = pparams["wd1"].shape[0]     # padded latent dim
    out_w = ip + 2 * lp

    weights = (
        pparams["w1"], pparams["b1"], pparams["w2"], pparams["b2"],
        pparams["wh"], pparams["bh"],
        pparams["wd1"], pparams["bd1"], pparams["wd2"], pparams["bd2"],
        pparams["wd3"], pparams["bd3"],
    )
    weight_bytes = sum(int(w.size) * w.dtype.itemsize for w in weights)

    # ---- batch tile: big enough to amortize ~0.35us/step and fill the MXU,
    # small enough to (a) fit VMEM and (b) give >= 2 tiles when B allows it
    # (so v7x can shard the "parallel" axis across its two TensorCores). ----
    if B >= 2 * SUBLANE:
        TB = min(512, _round_up((B + 1) // 2, SUBLANE))
    else:
        TB = _round_up(B, SUBLANE)

    def _est_vmem(tb):
        act = 2 * tb * (ip + lp + out_w) * 4        # double-buffered x/eps/out tiles
        tmp = tb * (4 * hp + 2 * lp + out_w) * 4    # rough in-kernel f32 temporaries
        return weight_bytes + act + tmp

    while TB > SUBLANE and _est_vmem(TB) > (40 << 20):
        TB = _round_up(TB // 2, SUBLANE)

    Bp = _round_up(B, TB)

    # ---- single-pad inputs (no zero-init + scatter); skip when already aligned ----
    xp = x if (Bp == B and ip == input_dim) else jnp.pad(
        x, ((0, Bp - B), (0, ip - input_dim)))
    epsp = eps if (Bp == B and lp == latent_dim) else jnp.pad(
        eps, ((0, Bp - B), (0, lp - latent_dim)))

    def tile_spec(width):
        # Batch-tiled activations / outputs (default double-buffered pipelining).
        return pl.BlockSpec((TB, width), lambda i: (i, 0))

    def resident_spec(arr):
        # Weights/biases: full block, constant index -> single resident buffer.
        return pl.BlockSpec(arr.shape, lambda i: (0, 0), pipeline_mode=pl.Buffered(1))

    in_specs = [tile_spec(ip), tile_spec(lp)] + [resident_spec(w) for w in weights]
    out_specs = tile_spec(out_w)

    kernel = functools.partial(_vae_kernel, input_pad=ip, latent_pad=lp)

    vmem_limit = int(min(48 << 20, max(32 << 20, 2 * _est_vmem(TB))))

    out = pl.pallas_call(
        kernel,
        grid=(Bp // TB,),
        in_specs=in_specs,
        out_specs=out_specs,
        out_shape=jax.ShapeDtypeStruct((Bp, out_w), jnp.float32),
        compiler_params=pltpu.CompilerParams(
            dimension_semantics=("parallel",),   # shard batch tiles across v7x TCs
            vmem_limit_bytes=vmem_limit,
        ),
    )(xp, epsp, *weights)

    recon = out[:B, :input_dim]
    mu = out[:B, ip:ip + latent_dim]
    logvar = out[:B, ip + lp:ip + lp + latent_dim]
    return recon, mu, logvar


def init_params(key, input_dim, hidden_dim, latent_dim):
    """Deterministic synthetic init at LOGICAL sizes; weights stored as [in, out]."""
    keys = jax.random.split(key, 7)

    def dense(k, din, dout):
        scale = 1.0 / jnp.sqrt(jnp.float32(din))
        w = jax.random.uniform(k, (din, dout), jnp.float32, -scale, scale)
        b = jnp.zeros((1, dout), jnp.float32)
        return w, b

    w1, b1 = dense(keys[0], input_dim, hidden_dim)
    w2, b2 = dense(keys[1], hidden_dim, hidden_dim)
    wmu, bmu = dense(keys[2], hidden_dim, latent_dim)
    wlv, blv = dense(keys[3], hidden_dim, latent_dim)
    wd1, bd1 = dense(keys[4], latent_dim, hidden_dim)
    wd2, bd2 = dense(keys[5], hidden_dim, hidden_dim)
    wd3, bd3 = dense(keys[6], hidden_dim, input_dim)
    return dict(
        w1=w1, b1=b1, w2=w2, b2=b2,
        wmu=wmu, bmu=bmu, wlv=wlv, blv=blv,
        wd1=wd1, bd1=bd1, wd2=wd2, bd2=bd2, wd3=wd3, bd3=bd3,
    )


def pad_params(p, input_dim, hidden_dim, latent_dim):
    """Zero-pad every feature dim to a multiple of 128 lanes (once, not per call),
    fuse the mu/logvar head into one [hidden_pad, 2*latent_pad] matrix, and store
    weights in bf16 (halves weight DMA bytes / resident VMEM).  Biases stay f32."""
    ip = _round_up(input_dim, LANE)
    hp = _round_up(hidden_dim, LANE)
    lp = _round_up(latent_dim, LANE)

    def padw(a, r, c):
        w = jnp.zeros((r, c), jnp.float32).at[:a.shape[0], :a.shape[1]].set(a)
        return w.astype(jnp.bfloat16)

    def padb(a, c):
        return jnp.zeros((1, c), jnp.float32).at[:, :a.shape[1]].set(a)

    wh = jnp.concatenate([padw(p["wmu"], hp, lp), padw(p["wlv"], hp, lp)], axis=1)
    bh = jnp.concatenate([padb(p["bmu"], lp), padb(p["blv"], lp)], axis=1)

    return dict(
        w1=padw(p["w1"], ip, hp), b1=padb(p["b1"], hp),
        w2=padw(p["w2"], hp, hp), b2=padb(p["b2"], hp),
        wh=wh, bh=bh,
        wd1=padw(p["wd1"], lp, hp), bd1=padb(p["bd1"], hp),
        wd2=padw(p["wd2"], hp, hp), bd2=padb(p["bd2"], hp),
        wd3=padw(p["wd3"], hp, ip), bd3=padb(p["bd3"], ip),
    )


def _reference_forward_f32(x, eps, p):
    relu = lambda a: jnp.maximum(a, 0.0)
    h = relu(x @ p["w1"] + p["b1"])
    h = relu(h @ p["w2"] + p["b2"])
    mu = h @ p["wmu"] + p["bmu"]
    logvar = h @ p["wlv"] + p["blv"]
    z = mu + eps * jnp.exp(0.5 * logvar)
    d = relu(z @ p["wd1"] + p["bd1"])
    d = relu(d @ p["wd2"] + p["bd2"])
    recon = jax.nn.sigmoid(d @ p["wd3"] + p["bd3"])
    return recon, mu, logvar


def _reference_forward_bf16(x, eps, p):
    """Mirrors the kernel's numerics: bf16 dot inputs, f32 accumulation/elementwise."""
    bf = jnp.bfloat16
    mm = lambda a, w: jnp.dot(a.astype(bf), w.astype(bf),
                              preferred_element_type=jnp.float32)
    relu = lambda a: jnp.maximum(a, 0.0)
    h = relu(mm(x, p["w1"]) + p["b1"])
    h = relu(mm(h, p["w2"]) + p["b2"])
    mu = mm(h, p["wmu"]) + p["bmu"]
    logvar = mm(h, p["wlv"]) + p["blv"]
    z = mu + eps * jnp.exp(0.5 * logvar)
    d = relu(mm(z, p["wd1"]) + p["bd1"])
    d = relu(mm(d, p["wd2"]) + p["bd2"])
    recon = jax.nn.sigmoid(mm(d, p["wd3"]) + p["bd3"])
    return recon, mu, logvar


if __name__ == "__main__":
    input_dim, hidden_dim, latent_dim = 16, 32, 8
    batch = 8

    key = jax.random.PRNGKey(0)
    k_x, k_eps, k_params = jax.random.split(key, 3)

    x = jax.random.normal(k_x, (batch, input_dim), jnp.float32)
    eps = jax.random.normal(k_eps, (batch, latent_dim), jnp.float32)
    params = init_params(k_params, input_dim, hidden_dim, latent_dim)
    pparams = pad_params(params, input_dim, hidden_dim, latent_dim)

    recon, mu, logvar = vae_forward(x, eps, pparams)
    jax.block_until_ready((recon, mu, logvar))

    # Numerics-matched reference (bf16 dot inputs, f32 accumulation) -> tight check.
    r_m, mu_m, lv_m = _reference_forward_bf16(x, eps, params)
    assert jnp.allclose(recon, r_m, atol=1e-3, rtol=1e-3), "recon mismatch (matched ref)"
    assert jnp.allclose(mu, mu_m, atol=1e-3, rtol=1e-3), "mu mismatch (matched ref)"
    assert jnp.allclose(logvar, lv_m, atol=1e-3, rtol=1e-3), "logvar mismatch (matched ref)"

    # Pure f32 reference -> loose check (bf16 weight rounding in the kernel).
    r_f, mu_f, lv_f = _reference_forward_f32(x, eps, params)
    assert jnp.allclose(recon, r_f, atol=5e-2, rtol=5e-2), "recon mismatch (f32 ref)"
    assert jnp.allclose(mu, mu_f, atol=5e-2, rtol=5e-2), "mu mismatch (f32 ref)"
    assert jnp.allclose(logvar, lv_f, atol=5e-2, rtol=5e-2), "logvar mismatch (f32 ref)"

    print("KERNEL_OK")
</pallas_src>

<mosaic_0001>
module attributes {stable_mosaic.version = 11 : i64} {
  func.func @_vae_kernel(%arg0: i32, %arg1: memref<8x128xf32, #tpu.memory_space<vmem>>, %arg2: memref<8x128xf32, #tpu.memory_space<vmem>>, %arg3: memref<128x128xbf16, #tpu.memory_space<vmem>>, %arg4: memref<1x128xf32, #tpu.memory_space<vmem>>, %arg5: memref<128x128xbf16, #tpu.memory_space<vmem>>, %arg6: memref<1x128xf32, #tpu.memory_space<vmem>>, %arg7: memref<128x256xbf16, #tpu.memory_space<vmem>>, %arg8: memref<1x256xf32, #tpu.memory_space<vmem>>, %arg9: memref<128x128xbf16, #tpu.memory_space<vmem>>, %arg10: memref<1x128xf32, #tpu.memory_space<vmem>>, %arg11: memref<128x128xbf16, #tpu.memory_space<vmem>>, %arg12: memref<1x128xf32, #tpu.memory_space<vmem>>, %arg13: memref<128x128xbf16, #tpu.memory_space<vmem>>, %arg14: memref<1x128xf32, #tpu.memory_space<vmem>>, %arg15: memref<8x384xf32, #tpu.memory_space<vmem>>) attributes {dimension_semantics = [#tpu.dimension_semantics<parallel>], iteration_bounds = array<i64: 1>, scalar_prefetch = 0 : i64, scratch_operands = 0 : i64, tpu.core_type = #tpu.core_type<tc>, window_params = [{transform_indices = @transform_0, window_bounds = array<i64: 8, 128>}, {transform_indices = @transform_1, window_bounds = array<i64: 8, 128>}, {pipeline_mode = #tpu.pipeline_mode<synchronous>, transform_indices = @transform_2, window_bounds = array<i64: 128, 128>}, {pipeline_mode = #tpu.pipeline_mode<synchronous>, transform_indices = @transform_3, window_bounds = array<i64: 1, 128>}, {pipeline_mode = #tpu.pipeline_mode<synchronous>, transform_indices = @transform_4, window_bounds = array<i64: 128, 128>}, {pipeline_mode = #tpu.pipeline_mode<synchronous>, transform_indices = @transform_5, window_bounds = array<i64: 1, 128>}, {pipeline_mode = #tpu.pipeline_mode<synchronous>, transform_indices = @transform_6, window_bounds = array<i64: 128, 256>}, {pipeline_mode = #tpu.pipeline_mode<synchronous>, transform_indices = @transform_7, window_bounds = array<i64: 1, 256>}, {pipeline_mode = #tpu.pipeline_mode<synchronous>, transform_indices = @transform_8, window_bounds = array<i64: 128, 128>}, {pipeline_mode = #tpu.pipeline_mode<synchronous>, transform_indices = @transform_9, window_bounds = array<i64: 1, 128>}, {pipeline_mode = #tpu.pipeline_mode<synchronous>, transform_indices = @transform_10, window_bounds = array<i64: 128, 128>}, {pipeline_mode = #tpu.pipeline_mode<synchronous>, transform_indices = @transform_11, window_bounds = array<i64: 1, 128>}, {pipeline_mode = #tpu.pipeline_mode<synchronous>, transform_indices = @transform_12, window_bounds = array<i64: 128, 128>}, {pipeline_mode = #tpu.pipeline_mode<synchronous>, transform_indices = @transform_13, window_bounds = array<i64: 1, 128>}, {transform_indices = @transform_14, window_bounds = array<i64: 8, 384>}]} {
    %c0 = arith.constant 0 : index
    %c0_0 = arith.constant 0 : index
    %0 = vector.load %arg1[%c0, %c0_0] : memref<8x128xf32, #tpu.memory_space<vmem>>, vector<8x128xf32>
    %1 = arith.truncf %0 : vector<8x128xf32> to vector<8x128xbf16>
    %c0_1 = arith.constant 0 : index
    %c0_2 = arith.constant 0 : index
    %2 = vector.load %arg3[%c0_1, %c0_2] : memref<128x128xbf16, #tpu.memory_space<vmem>>, vector<128x128xbf16>
    %cst = arith.constant dense<0.000000e+00> : vector<8x128xf32>
    %3 = tpu.matmul %1, %2, %cst {dimension_numbers = #tpu.dot_dimension_numbers<[1], [0], [0], [1], [0, 0, 1, 1], [], []>} : vector<8x128xbf16>, vector<128x128xbf16>, vector<8x128xf32> -> vector<8x128xf32>
    %c0_3 = arith.constant 0 : index
    %c0_4 = arith.constant 0 : index
    %4 = vector.load %arg4[%c0_3, %c0_4] : memref<1x128xf32, #tpu.memory_space<vmem>>, vector<1x128xf32>
    %5 = vector.broadcast %4 : vector<1x128xf32> to vector<8x128xf32>
    %6 = arith.addf %3, %5 : vector<8x128xf32>
    %cst_5 = arith.constant 0.000000e+00 : f32
    %7 = vector.broadcast %cst_5 : f32 to vector<8x128xf32>
    %8 = arith.maximumf %6, %7 : vector<8x128xf32>
    %9 = arith.truncf %8 : vector<8x128xf32> to vector<8x128xbf16>
    %c0_6 = arith.constant 0 : index
    %c0_7 = arith.constant 0 : index
    %10 = vector.load %arg5[%c0_6, %c0_7] : memref<128x128xbf16, #tpu.memory_space<vmem>>, vector<128x128xbf16>
    %cst_8 = arith.constant dense<0.000000e+00> : vector<8x128xf32>
    %11 = tpu.matmul %9, %10, %cst_8 {dimension_numbers = #tpu.dot_dimension_numbers<[1], [0], [0], [1], [0, 0, 1, 1], [], []>} : vector<8x128xbf16>, vector<128x128xbf16>, vector<8x128xf32> -> vector<8x128xf32>
    %c0_9 = arith.constant 0 : index
    %c0_10 = arith.constant 0 : index
    %12 = vector.load %arg6[%c0_9, %c0_10] : memref<1x128xf32, #tpu.memory_space<vmem>>, vector<1x128xf32>
    %13 = vector.broadcast %12 : vector<1x128xf32> to vector<8x128xf32>
    %14 = arith.addf %11, %13 : vector<8x128xf32>
    %cst_11 = arith.constant 0.000000e+00 : f32
    %15 = vector.broadcast %cst_11 : f32 to vector<8x128xf32>
    %16 = arith.maximumf %14, %15 : vector<8x128xf32>
    %17 = arith.truncf %16 : vector<8x128xf32> to vector<8x128xbf16>
    %c0_12 = arith.constant 0 : index
    %c0_13 = arith.constant 0 : index
    %18 = vector.load %arg7[%c0_12, %c0_13] : memref<128x256xbf16, #tpu.memory_space<vmem>>, vector<128x256xbf16>
    %cst_14 = arith.constant dense<0.000000e+00> : vector<8x256xf32>
    %19 = tpu.matmul %17, %18, %cst_14 {dimension_numbers = #tpu.dot_dimension_numbers<[1], [0], [0], [1], [0, 0, 1, 1], [], []>} : vector<8x128xbf16>, vector<128x256xbf16>, vector<8x256xf32> -> vector<8x256xf32>
    %c0_15 = arith.constant 0 : index
    %c0_16 = arith.constant 0 : index
    %20 = vector.load %arg8[%c0_15, %c0_16] : memref<1x256xf32, #tpu.memory_space<vmem>>, vector<1x256xf32>
    %21 = vector.broadcast %20 : vector<1x256xf32> to vector<8x256xf32>
    %22 = arith.addf %19, %21 : vector<8x256xf32>
    %23 = vector.extract_strided_slice %22 {offsets = [0, 0], sizes = [8, 128], strides = [1, 1]} : vector<8x256xf32> to vector<8x128xf32>
    %24 = vector.extract_strided_slice %22 {offsets = [0, 128], sizes = [8, 128], strides = [1, 1]} : vector<8x256xf32> to vector<8x128xf32>
    %c0_17 = arith.constant 0 : index
    %c0_18 = arith.constant 0 : index
    %25 = vector.load %arg2[%c0_17, %c0_18] : memref<8x128xf32, #tpu.memory_space<vmem>>, vector<8x128xf32>
    %cst_19 = arith.constant 5.000000e-01 : f32
    %26 = vector.broadcast %cst_19 : f32 to vector<8x128xf32>
    %27 = arith.mulf %26, %24 : vector<8x128xf32>
    %28 = math.exp %27 : vector<8x128xf32>
    %29 = arith.mulf %25, %28 : vector<8x128xf32>
    %30 = arith.addf %23, %29 : vector<8x128xf32>
    %31 = arith.truncf %30 : vector<8x128xf32> to vector<8x128xbf16>
    %c0_20 = arith.constant 0 : index
    %c0_21 = arith.constant 0 : index
    %32 = vector.load %arg9[%c0_20, %c0_21] : memref<128x128xbf16, #tpu.memory_space<vmem>>, vector<128x128xbf16>
    %cst_22 = arith.constant dense<0.000000e+00> : vector<8x128xf32>
    %33 = tpu.matmul %31, %32, %cst_22 {dimension_numbers = #tpu.dot_dimension_numbers<[1], [0], [0], [1], [0, 0, 1, 1], [], []>} : vector<8x128xbf16>, vector<128x128xbf16>, vector<8x128xf32> -> vector<8x128xf32>
    %c0_23 = arith.constant 0 : index
    %c0_24 = arith.constant 0 : index
    %34 = vector.load %arg10[%c0_23, %c0_24] : memref<1x128xf32, #tpu.memory_space<vmem>>, vector<1x128xf32>
    %35 = vector.broadcast %34 : vector<1x128xf32> to vector<8x128xf32>
    %36 = arith.addf %33, %35 : vector<8x128xf32>
    %cst_25 = arith.constant 0.000000e+00 : f32
    %37 = vector.broadcast %cst_25 : f32 to vector<8x128xf32>
    %38 = arith.maximumf %36, %37 : vector<8x128xf32>
    %39 = arith.truncf %38 : vector<8x128xf32> to vector<8x128xbf16>
    %c0_26 = arith.constant 0 : index
    %c0_27 = arith.constant 0 : index
    %40 = vector.load %arg11[%c0_26, %c0_27] : memref<128x128xbf16, #tpu.memory_space<vmem>>, vector<128x128xbf16>
    %cst_28 = arith.constant dense<0.000000e+00> : vector<8x128xf32>
    %41 = tpu.matmul %39, %40, %cst_28 {dimension_numbers = #tpu.dot_dimension_numbers<[1], [0], [0], [1], [0, 0, 1, 1], [], []>} : vector<8x128xbf16>, vector<128x128xbf16>, vector<8x128xf32> -> vector<8x128xf32>
    %c0_29 = arith.constant 0 : index
    %c0_30 = arith.constant 0 : index
    %42 = vector.load %arg12[%c0_29, %c0_30] : memref<1x128xf32, #tpu.memory_space<vmem>>, vector<1x128xf32>
    %43 = vector.broadcast %42 : vector<1x128xf32> to vector<8x128xf32>
    %44 = arith.addf %41, %43 : vector<8x128xf32>
    %cst_31 = arith.constant 0.000000e+00 : f32
    %45 = vector.broadcast %cst_31 : f32 to vector<8x128xf32>
    %46 = arith.maximumf %44, %45 : vector<8x128xf32>
    %47 = arith.truncf %46 : vector<8x128xf32> to vector<8x128xbf16>
    %c0_32 = arith.constant 0 : index
    %c0_33 = arith.constant 0 : index
    %48 = vector.load %arg13[%c0_32, %c0_33] : memref<128x128xbf16, #tpu.memory_space<vmem>>, vector<128x128xbf16>
    %cst_34 = arith.constant dense<0.000000e+00> : vector<8x128xf32>
    %49 = tpu.matmul %47, %48, %cst_34 {dimension_numbers = #tpu.dot_dimension_numbers<[1], [0], [0], [1], [0, 0, 1, 1], [], []>} : vector<8x128xbf16>, vector<128x128xbf16>, vector<8x128xf32> -> vector<8x128xf32>
    %c0_35 = arith.constant 0 : index
    %c0_36 = arith.constant 0 : index
    %50 = vector.load %arg14[%c0_35, %c0_36] : memref<1x128xf32, #tpu.memory_space<vmem>>, vector<1x128xf32>
    %51 = vector.broadcast %50 : vector<1x128xf32> to vector<8x128xf32>
    %52 = arith.addf %49, %51 : vector<8x128xf32>
    %53 = arith.negf %52 : vector<8x128xf32>
    %54 = math.exp %53 : vector<8x128xf32>
    %cst_37 = arith.constant 1.000000e+00 : f32
    %55 = vector.broadcast %cst_37 : f32 to vector<8x128xf32>
    %56 = arith.addf %55, %54 : vector<8x128xf32>
    %57 = arith.divf %55, %56 : vector<8x128xf32>
    %c0_38 = arith.constant 0 : index
    %c0_39 = arith.constant 0 : index
    %58 = vector.load %arg15[%c0_38, %c0_39] : memref<8x384xf32, #tpu.memory_space<vmem>>, vector<8x128xf32>
    tpu.vector_store %arg15[%c0_38, %c0_39], %57 {strides = array<i32>} : memref<8x384xf32, #tpu.memory_space<vmem>>, vector<8x128xf32>,
    %c0_40 = arith.constant 0 : index
    %c128 = arith.constant 128 : index
    %59 = vector.load %arg15[%c0_40, %c128] : memref<8x384xf32, #tpu.memory_space<vmem>>, vector<8x256xf32>
    tpu.vector_store %arg15[%c0_40, %c128], %22 {strides = array<i32>} : memref<8x384xf32, #tpu.memory_space<vmem>>, vector<8x256xf32>,
    return
  }
  func.func @transform_0(%arg0: i32) -> (i32, i32) {
    %c0_i32 = arith.constant 0 : i32
    %c0_i32_0 = arith.constant 0 : i32
    return %arg0, %c0_i32 : i32, i32
  }
  func.func @transform_1(%arg0: i32) -> (i32, i32) {
    %c0_i32 = arith.constant 0 : i32
    %c0_i32_0 = arith.constant 0 : i32
    return %arg0, %c0_i32 : i32, i32
  }
  func.func @transform_2(%arg0: i32) -> (i32, i32) {
    %c0_i32 = arith.constant 0 : i32
    %c0_i32_0 = arith.constant 0 : i32
    %c0_i32_1 = arith.constant 0 : i32
    return %c0_i32, %c0_i32_0 : i32, i32
  }
  func.func @transform_3(%arg0: i32) -> (i32, i32) {
    %c0_i32 = arith.constant 0 : i32
    %c0_i32_0 = arith.constant 0 : i32
    %c0_i32_1 = arith.constant 0 : i32
    return %c0_i32, %c0_i32_0 : i32, i32
  }
  func.func @transform_4(%arg0: i32) -> (i32, i32) {
    %c0_i32 = arith.constant 0 : i32
    %c0_i32_0 = arith.constant 0 : i32
    %c0_i32_1 = arith.constant 0 : i32
    return %c0_i32, %c0_i32_0 : i32, i32
  }
  func.func @transform_5(%arg0: i32) -> (i32, i32) {
    %c0_i32 = arith.constant 0 : i32
    %c0_i32_0 = arith.constant 0 : i32
    %c0_i32_1 = arith.constant 0 : i32
    return %c0_i32, %c0_i32_0 : i32, i32
  }
  func.func @transform_6(%arg0: i32) -> (i32, i32) {
    %c0_i32 = arith.constant 0 : i32
    %c0_i32_0 = arith.constant 0 : i32
    %c0_i32_1 = arith.constant 0 : i32
    return %c0_i32, %c0_i32_0 : i32, i32
  }
  func.func @transform_7(%arg0: i32) -> (i32, i32) {
    %c0_i32 = arith.constant 0 : i32
    %c0_i32_0 = arith.constant 0 : i32
    %c0_i32_1 = arith.constant 0 : i32
    return %c0_i32, %c0_i32_0 : i32, i32
  }
  func.func @transform_8(%arg0: i32) -> (i32, i32) {
    %c0_i32 = arith.constant 0 : i32
    %c0_i32_0 = arith.constant 0 : i32
    %c0_i32_1 = arith.constant 0 : i32
    return %c0_i32, %c0_i32_0 : i32, i32
  }
  func.func @transform_9(%arg0: i32) -> (i32, i32) {
    %c0_i32 = arith.constant 0 : i32
    %c0_i32_0 = arith.constant 0 : i32
    %c0_i32_1 = arith.constant 0 : i32
    return %c0_i32, %c0_i32_0 : i32, i32
  }
  func.func @transform_10(%arg0: i32) -> (i32, i32) {
    %c0_i32 = arith.constant 0 : i32
    %c0_i32_0 = arith.constant 0 : i32
    %c0_i32_1 = arith.constant 0 : i32
    return %c0_i32, %c0_i32_0 : i32, i32
  }
  func.func @transform_11(%arg0: i32) -> (i32, i32) {
    %c0_i32 = arith.constant 0 : i32
    %c0_i32_0 = arith.constant 0 : i32
    %c0_i32_1 = arith.constant 0 : i32
    return %c0_i32, %c0_i32_0 : i32, i32
  }
  func.func @transform_12(%arg0: i32) -> (i32, i32) {
    %c0_i32 = arith.constant 0 : i32
    %c0_i32_0 = arith.constant 0 : i32
    %c0_i32_1 = arith.constant 0 : i32
    return %c0_i32, %c0_i32_0 : i32, i32
  }
  func.func @transform_13(%arg0: i32) -> (i32, i32) {
    %c0_i32 = arith.constant 0 : i32
    %c0_i32_0 = arith.constant 0 : i32
    %c0_i32_1 = arith.constant 0 : i32
    return %c0_i32, %c0_i32_0 : i32, i32
  }
  func.func @transform_14(%arg0: i32) -> (i32, i32) {
    %c0_i32 = arith.constant 0 : i32
    %c0_i32_0 = arith.constant 0 : i32
    return %arg0, %c0_i32 : i32, i32
  }
}

</mosaic_0001>

<llo_original>
// kernel: vae_forward.1
$region0: #{vae_forward.1}
  #allocation0 [shape = 'u32[]', space=smem, size = 0x4, offset = 0x4, fixed_abs, tag = 'smem constant byte address 0x4 - core index']
  #allocation1 [shape = 'u32[144,128]{1,0:T(1,128)}', space=vmem, size = 0x12000, scoped, tag = 'internal scratch']
  %s0 = inlined_call_operand.vmem [shape: f32[8,128], index: 0, kind: input, shape index: {}]
  %s1 = inlined_call_operand.vmem [shape: f32[8,128], index: 1, kind: input, shape index: {}]
  %s2 = inlined_call_operand.hbm [shape: bf16[128,128], index: 2, kind: input, shape index: {}]
  %s3 = inlined_call_operand.vmem [shape: f32[1,128], index: 3, kind: input, shape index: {}]
  %s4 = inlined_call_operand.hbm [shape: bf16[128,128], index: 4, kind: input, shape index: {}]
  %s5 = inlined_call_operand.vmem [shape: f32[1,128], index: 5, kind: input, shape index: {}]
  %s6 = inlined_call_operand.hbm [shape: bf16[128,256], index: 6, kind: input, shape index: {}]
  %s7 = inlined_call_operand.vmem [shape: f32[1,256], index: 7, kind: input, shape index: {}]
  %s8 = inlined_call_operand.hbm [shape: bf16[128,128], index: 8, kind: input, shape index: {}]
  %s9 = inlined_call_operand.vmem [shape: f32[1,128], index: 9, kind: input, shape index: {}]
  %s10 = inlined_call_operand.hbm [shape: bf16[128,128], index: 10, kind: input, shape index: {}]
  %s11 = inlined_call_operand.vmem [shape: f32[1,128], index: 11, kind: input, shape index: {}]
  %s12 = inlined_call_operand.hbm [shape: bf16[128,128], index: 12, kind: input, shape index: {}]
  %s13 = inlined_call_operand.vmem [shape: f32[1,128], index: 13, kind: input, shape index: {}]
  %s14 = inlined_call_operand.vmem [shape: f32[8,384], index: 14, kind: output, shape index: {}]
  %s15 = sld [smem:[#allocation0]]
  $region90: #{vae_forward.1} parent=0
    _
  %s17 = ssub.s32 1, %s15
  %s18 = scalar_select 0, %s17, %s15
  $region1: #{vae_forward.1} parent=0
    #allocation2 [shape = 'u8[32768]{0}', space=vmem, size = 0x8000, scoped, tag = 'input window, operand 2, single buffered']
    #allocation3 [shape = 's32[1]{0}', space=sflag, size = 0x4, scoped, tag = 'scoped memory for vae_forward.1']
    #allocation4 [shape = 'u8[32768]{0}', space=vmem, size = 0x8000, scoped, tag = 'input window, operand 4, single buffered']
    #allocation5 [shape = 's32[1]{0}', space=sflag, size = 0x4, scoped, tag = 'scoped memory for vae_forward.1']
    #allocation6 [shape = 'u8[65536]{0}', space=vmem, size = 0x10000, scoped, tag = 'input window, operand 6, single buffered']
    #allocation7 [shape = 'u8[32768]{0}', space=vmem, size = 0x8000, scoped, tag = 'input window, operand 8, single buffered']
    #allocation8 [shape = 's32[1]{0}', space=sflag, size = 0x4, scoped, tag = 'scoped memory for vae_forward.1']
    #allocation9 [shape = 'u8[32768]{0}', space=vmem, size = 0x8000, scoped, tag = 'input window, operand 10, single buffered']
    #allocation10 [shape = 'u8[32768]{0}', space=vmem, size = 0x8000, scoped, tag = 'input window, operand 12, single buffered']
    #allocation11 [shape = 's32[1]{0}', space=sflag, size = 0x4, scoped, tag = 'scoped memory for vae_forward.1']
    %19 = vsyncpa [#allocation3], 0
    %20 = vsyncpa [#allocation5], 0
    %21 = vsyncpa [#allocation8], 0
    %22 = vsyncpa [#allocation11], 0
    // Predicated region
    $region2: #{vae_forward.1} parent=1 // pred_check
      _
    $region3: #{vae_forward.1} parent=1 // pred_check_branch
      %24 = sbr.rel (0) target = $region5
    $region4: #{vae_forward.1} parent=1 // pred_region
      _
    $region5: #{vae_forward.1} parent=1 // pred_fallthru
      _
    // Predicated region
    $region6: #{vae_forward.1} parent=1 // pred_check
      _
    $region7: #{vae_forward.1} parent=1 // pred_check_branch
      %26 = sbr.rel (0) target = $region9
    $region8: #{vae_forward.1} parent=1 // pred_region
      _
    $region9: #{vae_forward.1} parent=1 // pred_fallthru
      _
    // Predicated region
    $region10: #{vae_forward.1} parent=1 // pred_check
      _
    $region11: #{vae_forward.1} parent=1 // pred_check_branch
      %28 = sbr.rel (0) target = $region13
    $region12: #{vae_forward.1} parent=1 // pred_region
      %s30 = ssub.s32 1024, 1024
      %31 = vsyncadd [#allocation3], %s30
      %s32 = sshll.u32 [#allocation2], 4
      %s33 = int_to_ptr.vmem [resolvable:$true] %s32
      %38 = dma.hbm_to_vmem [thread:$0]  %s2, 1024, %s33, [#allocation3], 64, 64, 4
    $region13: #{vae_forward.1} parent=1 // pred_fallthru
      _
    // Predicated region
    $region14: #{vae_forward.1} parent=1 // pred_check
      _
    $region15: #{vae_forward.1} parent=1 // pred_check_branch
      %40 = sbr.rel (0) target = $region17
    $region16: #{vae_forward.1} parent=1 // pred_region
      _
    $region17: #{vae_forward.1} parent=1 // pred_fallthru
      _
    // Predicated region
    $region18: #{vae_forward.1} parent=1 // pred_check
      _
    $region19: #{vae_forward.1} parent=1 // pred_check_branch
      %42 = sbr.rel (0) target = $region21
    $region20: #{vae_forward.1} parent=1 // pred_region
      %s44 = ssub.s32 1024, 1024
      %45 = vsyncadd [#allocation5], %s44
      %s46 = sshll.u32 [#allocation4], 4
      %s47 = int_to_ptr.vmem [resolvable:$true] %s46
      %52 = dma.hbm_to_vmem [thread:$0]  %s4, 1024, %s47, [#allocation5], 64, 64, 4
    $region21: #{vae_forward.1} parent=1 // pred_fallthru
      _
    // Predicated region
    $region22: #{vae_forward.1} parent=1 // pred_check
      _
    $region23: #{vae_forward.1} parent=1 // pred_check_branch
      %54 = sbr.rel (0) target = $region25
    $region24: #{vae_forward.1} parent=1 // pred_region
      _
    $region25: #{vae_forward.1} parent=1 // pred_fallthru
      _
    // Predicated region
    $region26: #{vae_forward.1} parent=1 // pred_check
      _
    $region27: #{vae_forward.1} parent=1 // pred_check_branch
      %56 = sbr.rel (0) target = $region29
    $region28: #{vae_forward.1} parent=1 // pred_region
      %s58 = ssub.s32 2048, 2048
      %59 = vsyncadd [#allocation5], %s58
      %s60 = sshll.u32 [#allocation6], 4
      %s61 = int_to_ptr.vmem [resolvable:$true] %s60
      %66 = dma.hbm_to_vmem [thread:$0]  %s6, 2048, %s61, [#allocation5], 128, 128, 8
    $region29: #{vae_forward.1} parent=1 // pred_fallthru
      _
    // Predicated region
    $region30: #{vae_forward.1} parent=1 // pred_check
      _
    $region31: #{vae_forward.1} parent=1 // pred_check_branch
      %68 = sbr.rel (0) target = $region33
    $region32: #{vae_forward.1} parent=1 // pred_region
      _
    $region33: #{vae_forward.1} parent=1 // pred_fallthru
      _
    // Predicated region
    $region34: #{vae_forward.1} parent=1 // pred_check
      _
    $region35: #{vae_forward.1} parent=1 // pred_check_branch
      %70 = sbr.rel (0) target = $region37
    $region36: #{vae_forward.1} parent=1 // pred_region
      %s72 = ssub.s32 1024, 1024
      %73 = vsyncadd [#allocation8], %s72
      %s74 = sshll.u32 [#allocation7], 4
      %s75 = int_to_ptr.vmem [resolvable:$true] %s74
      %80 = dma.hbm_to_vmem [thread:$0]  %s8, 1024, %s75, [#allocation8], 64, 64, 4
    $region37: #{vae_forward.1} parent=1 // pred_fallthru
      _
    // Predicated region
    $region38: #{vae_forward.1} parent=1 // pred_check
      _
    $region39: #{vae_forward.1} parent=1 // pred_check_branch
      %82 = sbr.rel (0) target = $region41
    $region40: #{vae_forward.1} parent=1 // pred_region
      _
    $region41: #{vae_forward.1} parent=1 // pred_fallthru
      _
    // Predicated region
    $region42: #{vae_forward.1} parent=1 // pred_check
      _
    $region43: #{vae_forward.1} parent=1 // pred_check_branch
      %84 = sbr.rel (0) target = $region45
    $region44: #{vae_forward.1} parent=1 // pred_region
      %s86 = ssub.s32 1024, 1024
      %87 = vsyncadd [#allocation8], %s86
      %s88 = sshll.u32 [#allocation9], 4
      %s89 = int_to_ptr.vmem [resolvable:$true] %s88
      %94 = dma.hbm_to_vmem [thread:$0]  %s10, 1024, %s89, [#allocation8], 64, 64, 4
    $region45: #{vae_forward.1} parent=1 // pred_fallthru
      _
    // Predicated region
    $region46: #{vae_forward.1} parent=1 // pred_check
      _
    $region47: #{vae_forward.1} parent=1 // pred_check_branch
      %96 = sbr.rel (0) target = $region49
    $region48: #{vae_forward.1} parent=1 // pred_region
      _
    $region49: #{vae_forward.1} parent=1 // pred_fallthru
      _
    // Predicated region
    $region50: #{vae_forward.1} parent=1 // pred_check
      _
    $region51: #{vae_forward.1} parent=1 // pred_check_branch
      %98 = sbr.rel (0) target = $region53
    $region52: #{vae_forward.1} parent=1 // pred_region
      %s100 = ssub.s32 1024, 1024
      %101 = vsyncadd [#allocation11], %s100
      %s102 = sshll.u32 [#allocation10], 4
      %s103 = int_to_ptr.vmem [resolvable:$true] %s102
      %108 = dma.hbm_to_vmem [thread:$0]  %s12, 1024, %s103, [#allocation11], 64, 64, 4
    $region53: #{vae_forward.1} parent=1 // pred_fallthru
      _
    // Predicated region
    $region54: #{vae_forward.1} parent=1 // pred_check
      _
    $region55: #{vae_forward.1} parent=1 // pred_check_branch
      %110 = sbr.rel (0) target = $region57
    $region56: #{vae_forward.1} parent=1 // pred_region
      _
    $region57: #{vae_forward.1} parent=1 // pred_fallthru
      _
    // Predicated region
    $region58: #{vae_forward.1} parent=1 // pred_check
      _
    $region59: #{vae_forward.1} parent=1 // pred_check_branch
      %112 = sbr.rel (0) target = $region61
    $region60: #{vae_forward.1} parent=1 // pred_region
      %113 = dma.done [#allocation3], 1024
    $region61: #{vae_forward.1} parent=1 // pred_fallthru
      _
    // Predicated region
    $region62: #{vae_forward.1} parent=1 // pred_check
      _
    $region63: #{vae_forward.1} parent=1 // pred_check_branch
      %115 = sbr.rel (0) target = $region65
    $region64: #{vae_forward.1} parent=1 // pred_region
      %116 = dma.done [#allocation5], 1024
    $region65: #{vae_forward.1} parent=1 // pred_fallthru
      _
    // Predicated region
    $region66: #{vae_forward.1} parent=1 // pred_check
      _
    $region67: #{vae_forward.1} parent=1 // pred_check_branch
      %118 = sbr.rel (0) target = $region69
    $region68: #{vae_forward.1} parent=1 // pred_region
      %119 = dma.done [#allocation5], 2048
    $region69: #{vae_forward.1} parent=1 // pred_fallthru
      _
    // Predicated region
    $region70: #{vae_forward.1} parent=1 // pred_check
      _
    $region71: #{vae_forward.1} parent=1 // pred_check_branch
      %121 = sbr.rel (0) target = $region73
    $region72: #{vae_forward.1} parent=1 // pred_region
      %122 = dma.done [#allocation8], 1024
    $region73: #{vae_forward.1} parent=1 // pred_fallthru
      _
    // Predicated region
    $region74: #{vae_forward.1} parent=1 // pred_check
      _
    $region75: #{vae_forward.1} parent=1 // pred_check_branch
      %124 = sbr.rel (0) target = $region77
    $region76: #{vae_forward.1} parent=1 // pred_region
      %125 = dma.done [#allocation8], 1024
    $region77: #{vae_forward.1} parent=1 // pred_fallthru
      _
    // Predicated region
    $region78: #{vae_forward.1} parent=1 // pred_check
      _
    $region79: #{vae_forward.1} parent=1 // pred_check_branch
      %127 = sbr.rel (0) target = $region81
    $region80: #{vae_forward.1} parent=1 // pred_region
      %128 = dma.done [#allocation11], 1024
    $region81: #{vae_forward.1} parent=1 // pred_fallthru
      _
    %v130 = vld [vmem:[%s0] sm:$0xff]
    %v131 = vpack.c.bf16 %v130, %v130
    %v132 = vld [vmem:[#allocation2] sm:$0xf]
    %v133 = vld [vmem:[#allocation2 + $0x4] sm:$0xf]
    %v134 = vld [vmem:[#allocation2 + $0x8] sm:$0xf]
    %v135 = vld [vmem:[#allocation2 + $0xc] sm:$0xf]
    %v136 = vld [vmem:[#allocation2 + $0x10] sm:$0xf]
    %v137 = vld [vmem:[#allocation2 + $0x14] sm:$0xf]
    %v138 = vld [vmem:[#allocation2 + $0x18] sm:$0xf]
    %v139 = vld [vmem:[#allocation2 + $0x1c] sm:$0xf]
    %v140 = vld [vmem:[#allocation2 + $0x20] sm:$0xf]
    %v141 = vld [vmem:[#allocation2 + $0x24] sm:$0xf]
    %v142 = vld [vmem:[#allocation2 + $0x28] sm:$0xf]
    %v143 = vld [vmem:[#allocation2 + $0x2c] sm:$0xf]
    %v144 = vld [vmem:[#allocation2 + $0x30] sm:$0xf]
    %v145 = vld [vmem:[#allocation2 + $0x34] sm:$0xf]
    %v146 = vld [vmem:[#allocation2 + $0x38] sm:$0xf]
    %v147 = vld [vmem:[#allocation2 + $0x3c] sm:$0xf]
    %v148 = vld [vmem:[%s3] sm:$0x1]
    %v150 = vlaneseq
    %v151 = vshrl.u32 %v150, 7
    %v152 = vsub.s32 0, %v151
    %v153 = vrot.slane %v148, %v152
    %v171 = vunpack.c.l.b16 %v132
    %v172 = vunpack.c.l.b16 %v133
    %v173 = vunpack.c.l.b16 %v134
    %v174 = vunpack.c.l.b16 %v135
    %v175 = vunpack.c.l.b16 %v136
    %v176 = vunpack.c.l.b16 %v137
    %v177 = vunpack.c.l.b16 %v138
    %v178 = vunpack.c.l.b16 %v139
    %v179 = vunpack.c.l.b16 %v140
    %v180 = vunpack.c.l.b16 %v141
    %v181 = vunpack.c.l.b16 %v142
    %v182 = vunpack.c.l.b16 %v143
    %v183 = vunpack.c.l.b16 %v144
    %v184 = vunpack.c.l.b16 %v145
    %v185 = vunpack.c.l.b16 %v146
    %v186 = vunpack.c.l.b16 %v147
    %v187 = vpack.c.b16 %v172, %v171
    %v188 = vpack.c.b16 %v174, %v173
    %v189 = vpack.c.b16 %v176, %v175
    %v190 = vpack.c.b16 %v178, %v177
    %v191 = vpack.c.b16 %v180, %v179
    %v192 = vpack.c.b16 %v182, %v181
    %v193 = vpack.c.b16 %v184, %v183
    %v194 = vpack.c.b16 %v186, %v185
    %203 = vmatprep.subr.bf16.mxu0 0
    %204 = vmatpush1.bf16.msra.mxu0 %v187
    %205 = vmatprep.subr.bf16.mxu0 0
    %206 = vmatpush1.bf16.msra.mxu0 %v188
    %207 = vmatprep.subr.bf16.mxu0 0
    %208 = vmatpush1.bf16.msra.mxu0 %v189
    %209 = vmatprep.subr.bf16.mxu0 0
    %210 = vmatpush1.bf16.msra.mxu0 %v190
    %211 = vmatprep.subr.bf16.mxu0 0
    %212 = vmatpush1.bf16.msra.mxu0 %v191
    %213 = vmatprep.subr.bf16.mxu0 0
    %214 = vmatpush1.bf16.msra.mxu0 %v192
    %215 = vmatprep.subr.bf16.mxu0 0
    %216 = vmatpush1.bf16.msra.mxu0 %v193
    %217 = vmatprep.subr.bf16.mxu0 0
    %218 = vmatpush1.bf16.msra.mxu0 %v194
    %219 = vmatprep.subr.bf16.mxu0 0
    %220 = vmatpush1.bf16.msra.mxu0 0
    %221 = vmatprep.subr.bf16.mxu0 0
    %222 = vmatpush1.bf16.msra.mxu0 0
    %223 = vmatprep.subr.bf16.mxu0 0
    %224 = vmatpush1.bf16.msra.mxu0 0
    %225 = vmatprep.subr.bf16.mxu0 0
    %226 = vmatpush1.bf16.msra.mxu0 0
    %227 = vmatprep.subr.bf16.mxu0 0
    %228 = vmatpush1.bf16.msra.mxu0 0
    %229 = vmatprep.subr.bf16.mxu0 0
    %230 = vmatpush1.bf16.msra.mxu0 0
    %231 = vmatprep.subr.bf16.mxu0 0
    %232 = vmatpush1.bf16.msra.mxu0 0
    %233 = vmatprep.subr.bf16.mxu0 0
    %234 = vmatpush1.bf16.msra.mxu0 0
    %235 = vmatprep.mubr.bf16.mxu0 0
    %236 = vmatmul.mubr.bf16.gmra.mrb[0].mxu0 %v131
    %v237 = vpop.f32.mrb[0].mxu0
    %v238 = vadd.f32 %v153, %v237
    %v239 = vpop.f32.mrb[0].mxu0
    %v240 = vpop.f32.mrb[0].mxu0
    %v241 = vpop.f32.mrb[0].mxu0
    %242 = vdwg.mxu0
    %v243 = vmax.f32 %v238, 0.0
    %v244 = vpack.c.bf16 %v243, %v243
    %v245 = vld [vmem:[#allocation4] sm:$0xf]
    %v246 = vld [vmem:[#allocation4 + $0x4] sm:$0xf]
    %v247 = vld [vmem:[#allocation4 + $0x8] sm:$0xf]
    %v248 = vld [vmem:[#allocation4 + $0xc] sm:$0xf]
    %v249 = vld [vmem:[#allocation4 + $0x10] sm:$0xf]
    %v250 = vld [vmem:[#allocation4 + $0x14] sm:$0xf]
    %v251 = vld [vmem:[#allocation4 + $0x18] sm:$0xf]
    %v252 = vld [vmem:[#allocation4 + $0x1c] sm:$0xf]
    %v253 = vld [vmem:[#allocation4 + $0x20] sm:$0xf]
    %v254 = vld [vmem:[#allocation4 + $0x24] sm:$0xf]
    %v255 = vld [vmem:[#allocation4 + $0x28] sm:$0xf]
    %v256 = vld [vmem:[#allocation4 + $0x2c] sm:$0xf]
    %v257 = vld [vmem:[#allocation4 + $0x30] sm:$0xf]
    %v258 = vld [vmem:[#allocation4 + $0x34] sm:$0xf]
    %v259 = vld [vmem:[#allocation4 + $0x38] sm:$0xf]
    %v260 = vld [vmem:[#allocation4 + $0x3c] sm:$0xf]
    %v261 = vld [vmem:[%s5] sm:$0x1]
    %v263 = vlaneseq
    %v264 = vshrl.u32 %v263, 7
    %v265 = vsub.s32 0, %v264
    %v266 = vrot.slane %v261, %v265
    %v284 = vunpack.c.l.b16 %v245
    %v285 = vunpack.c.l.b16 %v246
    %v286 = vunpack.c.l.b16 %v247
    %v287 = vunpack.c.l.b16 %v248
    %v288 = vunpack.c.l.b16 %v249
    %v289 = vunpack.c.l.b16 %v250
    %v290 = vunpack.c.l.b16 %v251
    %v291 = vunpack.c.l.b16 %v252
    %v292 = vunpack.c.l.b16 %v253
    %v293 = vunpack.c.l.b16 %v254
    %v294 = vunpack.c.l.b16 %v255
    %v295 = vunpack.c.l.b16 %v256
    %v296 = vunpack.c.l.b16 %v257
    %v297 = vunpack.c.l.b16 %v258
    %v298 = vunpack.c.l.b16 %v259
    %v299 = vunpack.c.l.b16 %v260
    %v300 = vpack.c.b16 %v285, %v284
    %v301 = vpack.c.b16 %v287, %v286
    %v302 = vpack.c.b16 %v289, %v288
    %v303 = vpack.c.b16 %v291, %v290
    %v304 = vpack.c.b16 %v293, %v292
    %v305 = vpack.c.b16 %v295, %v294
    %v306 = vpack.c.b16 %v297, %v296
    %v307 = vpack.c.b16 %v299, %v298
    %316 = vmatprep.subr.bf16.mxu0 0
    %317 = vmatpush1.bf16.msra.mxu0 %v300
    %318 = vmatprep.subr.bf16.mxu0 0
    %319 = vmatpush1.bf16.msra.mxu0 %v301
    %320 = vmatprep.subr.bf16.mxu0 0
    %321 = vmatpush1.bf16.msra.mxu0 %v302
    %322 = vmatprep.subr.bf16.mxu0 0
    %323 = vmatpush1.bf16.msra.mxu0 %v303
    %324 = vmatprep.subr.bf16.mxu0 0
    %325 = vmatpush1.bf16.msra.mxu0 %v304
    %326 = vmatprep.subr.bf16.mxu0 0
    %327 = vmatpush1.bf16.msra.mxu0 %v305
    %328 = vmatprep.subr.bf16.mxu0 0
    %329 = vmatpush1.bf16.msra.mxu0 %v306
    %330 = vmatprep.subr.bf16.mxu0 0
    %331 = vmatpush1.bf16.msra.mxu0 %v307
    %332 = vmatprep.subr.bf16.mxu0 0
    %333 = vmatpush1.bf16.msra.mxu0 0
    %334 = vmatprep.subr.bf16.mxu0 0
    %335 = vmatpush1.bf16.msra.mxu0 0
    %336 = vmatprep.subr.bf16.mxu0 0
    %337 = vmatpush1.bf16.msra.mxu0 0
    %338 = vmatprep.subr.bf16.mxu0 0
    %339 = vmatpush1.bf16.msra.mxu0 0
    %340 = vmatprep.subr.bf16.mxu0 0
    %341 = vmatpush1.bf16.msra.mxu0 0
    %342 = vmatprep.subr.bf16.mxu0 0
    %343 = vmatpush1.bf16.msra.mxu0 0
    %344 = vmatprep.subr.bf16.mxu0 0
    %345 = vmatpush1.bf16.msra.mxu0 0
    %346 = vmatprep.subr.bf16.mxu0 0
    %347 = vmatpush1.bf16.msra.mxu0 0
    %348 = vmatprep.mubr.bf16.mxu0 0
    %349 = vmatmul.mubr.bf16.gmra.mrb[0].mxu0 %v244
    %v350 = vpop.f32.mrb[0].mxu0
    %v351 = vadd.f32 %v266, %v350
    %v352 = vpop.f32.mrb[0].mxu0
    %v353 = vpop.f32.mrb[0].mxu0
    %v354 = vpop.f32.mrb[0].mxu0
    %355 = vdwg.mxu0
    %v356 = vmax.f32 %v351, 0.0
    %v357 = vpack.c.bf16 %v356, %v356
    %v358 = vld [vmem:[#allocation6] sm:$0xff]
    %v359 = vld [vmem:[#allocation6 + $0x8] sm:$0xff]
    %v360 = vld [vmem:[#allocation6 + $0x10] sm:$0xff]
    %v361 = vld [vmem:[#allocation6 + $0x18] sm:$0xff]
    %v362 = vld [vmem:[#allocation6 + $0x20] sm:$0xff]
    %v363 = vld [vmem:[#allocation6 + $0x28] sm:$0xff]
    %v364 = vld [vmem:[#allocation6 + $0x30] sm:$0xff]
    %v365 = vld [vmem:[#allocation6 + $0x38] sm:$0xff]
    %v366 = vld [vmem:[#allocation6 + $0x40] sm:$0xff]
    %v367 = vld [vmem:[#allocation6 + $0x48] sm:$0xff]
    %v368 = vld [vmem:[#allocation6 + $0x50] sm:$0xff]
    %v369 = vld [vmem:[#allocation6 + $0x58] sm:$0xff]
    %v370 = vld [vmem:[#allocation6 + $0x60] sm:$0xff]
    %v371 = vld [vmem:[#allocation6 + $0x68] sm:$0xff]
    %v372 = vld [vmem:[#allocation6 + $0x70] sm:$0xff]
    %v373 = vld [vmem:[#allocation6 + $0x78] sm:$0xff]
    %v374 = vld [vmem:[%s7] sm:$0x3]
    %v376 = vlaneseq
    %v377 = vshrl.u32 %v376, 7
    %v378 = vsub.s32 0, %v377
    %v379 = vrot.slane %v374, %v378
    %v380 = vlaneseq
    %v381 = vshrl.u32 %v380, 7
    %v382 = vsub.s32 1, %v381
    %v383 = vrot.slane %v374, %v382
    %v402 = vunpack.c.l.b16 %v358
    %v403 = vunpack.c.h.b16 %v358
    %v404 = vunpack.c.l.b16 %v359
    %v405 = vunpack.c.h.b16 %v359
    %v406 = vunpack.c.l.b16 %v360
    %v407 = vunpack.c.h.b16 %v360
    %v408 = vunpack.c.l.b16 %v361
    %v409 = vunpack.c.h.b16 %v361
    %v410 = vunpack.c.l.b16 %v362
    %v411 = vunpack.c.h.b16 %v362
    %v412 = vunpack.c.l.b16 %v363
    %v413 = vunpack.c.h.b16 %v363
    %v414 = vunpack.c.l.b16 %v364
    %v415 = vunpack.c.h.b16 %v364
    %v416 = vunpack.c.l.b16 %v365
    %v417 = vunpack.c.h.b16 %v365
    %v418 = vunpack.c.l.b16 %v366
    %v419 = vunpack.c.h.b16 %v366
    %v420 = vunpack.c.l.b16 %v367
    %v421 = vunpack.c.h.b16 %v367
    %v422 = vunpack.c.l.b16 %v368
    %v423 = vunpack.c.h.b16 %v368
    %v424 = vunpack.c.l.b16 %v369
    %v425 = vunpack.c.h.b16 %v369
    %v426 = vunpack.c.l.b16 %v370
    %v427 = vunpack.c.h.b16 %v370
    %v428 = vunpack.c.l.b16 %v371
    %v429 = vunpack.c.h.b16 %v371
    %v430 = vunpack.c.l.b16 %v372
    %v431 = vunpack.c.h.b16 %v372
    %v432 = vunpack.c.l.b16 %v373
    %v433 = vunpack.c.h.b16 %v373
    %v434 = vpack.c.b16 %v404, %v402
    %v435 = vpack.c.b16 %v405, %v403
    %v436 = vpack.c.b16 %v408, %v406
    %v437 = vpack.c.b16 %v409, %v407
    %v438 = vpack.c.b16 %v412, %v410
    %v439 = vpack.c.b16 %v413, %v411
    %v440 = vpack.c.b16 %v416, %v414
    %v441 = vpack.c.b16 %v417, %v415
    %v442 = vpack.c.b16 %v420, %v418
    %v443 = vpack.c.b16 %v421, %v419
    %v444 = vpack.c.b16 %v424, %v422
    %v445 = vpack.c.b16 %v425, %v423
    %v446 = vpack.c.b16 %v428, %v426
    %v447 = vpack.c.b16 %v429, %v427
    %v448 = vpack.c.b16 %v432, %v430
    %v449 = vpack.c.b16 %v433, %v431
    %466 = vmatprep.subr.bf16.mxu0 %v435
    %467 = vmatpush1.bf16.msra.mxu0 %v434
    %468 = vmatprep.subr.bf16.mxu0 %v437
    %469 = vmatpush1.bf16.msra.mxu0 %v436
    %470 = vmatprep.subr.bf16.mxu0 %v439
    %471 = vmatpush1.bf16.msra.mxu0 %v438
    %472 = vmatprep.subr.bf16.mxu0 %v441
    %473 = vmatpush1.bf16.msra.mxu0 %v440
    %474 = vmatprep.subr.bf16.mxu0 %v443
    %475 = vmatpush1.bf16.msra.mxu0 %v442
    %476 = vmatprep.subr.bf16.mxu0 %v445
    %477 = vmatpush1.bf16.msra.mxu0 %v444
    %478 = vmatprep.subr.bf16.mxu0 %v447
    %479 = vmatpush1.bf16.msra.mxu0 %v446
    %480 = vmatprep.subr.bf16.mxu0 %v449
    %481 = vmatpush1.bf16.msra.mxu0 %v448
    %482 = vmatprep.subr.bf16.mxu0 0
    %483 = vmatpush1.bf16.msra.mxu0 0
    %484 = vmatprep.subr.bf16.mxu0 0
    %485 = vmatpush1.bf16.msra.mxu0 0
    %486 = vmatprep.subr.bf16.mxu0 0
    %487 = vmatpush1.bf16.msra.mxu0 0
    %488 = vmatprep.subr.bf16.mxu0 0
    %489 = vmatpush1.bf16.msra.mxu0 0
    %490 = vmatprep.subr.bf16.mxu0 0
    %491 = vmatpush1.bf16.msra.mxu0 0
    %492 = vmatprep.subr.bf16.mxu0 0
    %493 = vmatpush1.bf16.msra.mxu0 0
    %494 = vmatprep.subr.bf16.mxu0 0
    %495 = vmatpush1.bf16.msra.mxu0 0
    %496 = vmatprep.subr.bf16.mxu0 0
    %497 = vmatpush1.bf16.msra.mxu0 0
    %498 = vmatprep.mubr.bf16.mxu0 0
    %499 = vmatmul.mubr.bf16.gmra.mrb[0].mxu0 %v357
    %v500 = vpop.f32.mrb[0].mxu0
    %v501 = vadd.f32 %v379, %v500
    %v502 = vpop.f32.mrb[0].mxu0
    %v503 = vadd.f32 %v383, %v502
    %v504 = vpop.f32.mrb[0].mxu0
    %v505 = vpop.f32.mrb[0].mxu0
    %506 = vdwg.mxu0
    %v507 = vld [vmem:[%s1] sm:$0xff]
    %v508 = vmul.f32 %v503, 0.5
    %v509 = vmul.f32 %v508, 1.442695
    %v510 = vpow.pop %v509
    %v511 = vmul.f32 %v507, %v510
    %v512 = vadd.f32 %v501, %v511
    %v513 = vpack.c.bf16 %v512, %v512
    %v514 = vld [vmem:[#allocation7] sm:$0xf]
    %v515 = vld [vmem:[#allocation7 + $0x4] sm:$0xf]
    %v516 = vld [vmem:[#allocation7 + $0x8] sm:$0xf]
    %v517 = vld [vmem:[#allocation7 + $0xc] sm:$0xf]
    %v518 = vld [vmem:[#allocation7 + $0x10] sm:$0xf]
    %v519 = vld [vmem:[#allocation7 + $0x14] sm:$0xf]
    %v520 = vld [vmem:[#allocation7 + $0x18] sm:$0xf]
    %v521 = vld [vmem:[#allocation7 + $0x1c] sm:$0xf]
    %v522 = vld [vmem:[#allocation7 + $0x20] sm:$0xf]
    %v523 = vld [vmem:[#allocation7 + $0x24] sm:$0xf]
    %v524 = vld [vmem:[#allocation7 + $0x28] sm:$0xf]
    %v525 = vld [vmem:[#allocation7 + $0x2c] sm:$0xf]
    %v526 = vld [vmem:[#allocation7 + $0x30] sm:$0xf]
    %v527 = vld [vmem:[#allocation7 + $0x34] sm:$0xf]
    %v528 = vld [vmem:[#allocation7 + $0x38] sm:$0xf]
    %v529 = vld [vmem:[#allocation7 + $0x3c] sm:$0xf]
    %v530 = vld [vmem:[%s9] sm:$0x1]
    %v532 = vlaneseq
    %v533 = vshrl.u32 %v532, 7
    %v534 = vsub.s32 0, %v533
    %v535 = vrot.slane %v530, %v534
    %v553 = vunpack.c.l.b16 %v514
    %v554 = vunpack.c.l.b16 %v515
    %v555 = vunpack.c.l.b16 %v516
    %v556 = vunpack.c.l.b16 %v517
    %v557 = vunpack.c.l.b16 %v518
    %v558 = vunpack.c.l.b16 %v519
    %v559 = vunpack.c.l.b16 %v520
    %v560 = vunpack.c.l.b16 %v521
    %v561 = vunpack.c.l.b16 %v522
    %v562 = vunpack.c.l.b16 %v523
    %v563 = vunpack.c.l.b16 %v524
    %v564 = vunpack.c.l.b16 %v525
    %v565 = vunpack.c.l.b16 %v526
    %v566 = vunpack.c.l.b16 %v527
    %v567 = vunpack.c.l.b16 %v528
    %v568 = vunpack.c.l.b16 %v529
    %v569 = vpack.c.b16 %v554, %v553
    %v570 = vpack.c.b16 %v556, %v555
    %v571 = vpack.c.b16 %v558, %v557
    %v572 = vpack.c.b16 %v560, %v559
    %v573 = vpack.c.b16 %v562, %v561
    %v574 = vpack.c.b16 %v564, %v563
    %v575 = vpack.c.b16 %v566, %v565
    %v576 = vpack.c.b16 %v568, %v567
    %585 = vmatprep.subr.bf16.mxu0 0
    %586 = vmatpush1.bf16.msra.mxu0 %v569
    %587 = vmatprep.subr.bf16.mxu0 0
    %588 = vmatpush1.bf16.msra.mxu0 %v570
    %589 = vmatprep.subr.bf16.mxu0 0
    %590 = vmatpush1.bf16.msra.mxu0 %v571
    %591 = vmatprep.subr.bf16.mxu0 0
    %592 = vmatpush1.bf16.msra.mxu0 %v572
    %593 = vmatprep.subr.bf16.mxu0 0
    %594 = vmatpush1.bf16.msra.mxu0 %v573
    %595 = vmatprep.subr.bf16.mxu0 0
    %596 = vmatpush1.bf16.msra.mxu0 %v574
    %597 = vmatprep.subr.bf16.mxu0 0
    %598 = vmatpush1.bf16.msra.mxu0 %v575
    %599 = vmatprep.subr.bf16.mxu0 0
    %600 = vmatpush1.bf16.msra.mxu0 %v576
    %601 = vmatprep.subr.bf16.mxu0 0
    %602 = vmatpush1.bf16.msra.mxu0 0
    %603 = vmatprep.subr.bf16.mxu0 0
    %604 = vmatpush1.bf16.msra.mxu0 0
    %605 = vmatprep.subr.bf16.mxu0 0
    %606 = vmatpush1.bf16.msra.mxu0 0
    %607 = vmatprep.subr.bf16.mxu0 0
    %608 = vmatpush1.bf16.msra.mxu0 0
    %609 = vmatprep.subr.bf16.mxu0 0
    %610 = vmatpush1.bf16.msra.mxu0 0
    %611 = vmatprep.subr.bf16.mxu0 0
    %612 = vmatpush1.bf16.msra.mxu0 0
    %613 = vmatprep.subr.bf16.mxu0 0
    %614 = vmatpush1.bf16.msra.mxu0 0
    %615 = vmatprep.subr.bf16.mxu0 0
    %616 = vmatpush1.bf16.msra.mxu0 0
    %617 = vmatprep.mubr.bf16.mxu0 0
    %618 = vmatmul.mubr.bf16.gmra.mrb[0].mxu0 %v513
    %v619 = vpop.f32.mrb[0].mxu0
    %v620 = vadd.f32 %v535, %v619
    %v621 = vpop.f32.mrb[0].mxu0
    %v622 = vpop.f32.mrb[0].mxu0
    %v623 = vpop.f32.mrb[0].mxu0
    %624 = vdwg.mxu0
    %v625 = vmax.f32 %v620, 0.0
    %v626 = vpack.c.bf16 %v625, %v625
    %v627 = vld [vmem:[#allocation9] sm:$0xf]
    %v628 = vld [vmem:[#allocation9 + $0x4] sm:$0xf]
    %v629 = vld [vmem:[#allocation9 + $0x8] sm:$0xf]
    %v630 = vld [vmem:[#allocation9 + $0xc] sm:$0xf]
    %v631 = vld [vmem:[#allocation9 + $0x10] sm:$0xf]
    %v632 = vld [vmem:[#allocation9 + $0x14] sm:$0xf]
    %v633 = vld [vmem:[#allocation9 + $0x18] sm:$0xf]
    %v634 = vld [vmem:[#allocation9 + $0x1c] sm:$0xf]
    %v635 = vld [vmem:[#allocation9 + $0x20] sm:$0xf]
    %v636 = vld [vmem:[#allocation9 + $0x24] sm:$0xf]
    %v637 = vld [vmem:[#allocation9 + $0x28] sm:$0xf]
    %v638 = vld [vmem:[#allocation9 + $0x2c] sm:$0xf]
    %v639 = vld [vmem:[#allocation9 + $0x30] sm:$0xf]
    %v640 = vld [vmem:[#allocation9 + $0x34] sm:$0xf]
    %v641 = vld [vmem:[#allocation9 + $0x38] sm:$0xf]
    %v642 = vld [vmem:[#allocation9 + $0x3c] sm:$0xf]
    %v643 = vld [vmem:[%s11] sm:$0x1]
    %v645 = vlaneseq
    %v646 = vshrl.u32 %v645, 7
    %v647 = vsub.s32 0, %v646
    %v648 = vrot.slane %v643, %v647
    %v666 = vunpack.c.l.b16 %v627
    %v667 = vunpack.c.l.b16 %v628
    %v668 = vunpack.c.l.b16 %v629
    %v669 = vunpack.c.l.b16 %v630
    %v670 = vunpack.c.l.b16 %v631
    %v671 = vunpack.c.l.b16 %v632
    %v672 = vunpack.c.l.b16 %v633
    %v673 = vunpack.c.l.b16 %v634
    %v674 = vunpack.c.l.b16 %v635
    %v675 = vunpack.c.l.b16 %v636
    %v676 = vunpack.c.l.b16 %v637
    %v677 = vunpack.c.l.b16 %v638
    %v678 = vunpack.c.l.b16 %v639
    %v679 = vunpack.c.l.b16 %v640
    %v680 = vunpack.c.l.b16 %v641
    %v681 = vunpack.c.l.b16 %v642
    %v682 = vpack.c.b16 %v667, %v666
    %v683 = vpack.c.b16 %v669, %v668
    %v684 = vpack.c.b16 %v671, %v670
    %v685 = vpack.c.b16 %v673, %v672
    %v686 = vpack.c.b16 %v675, %v674
    %v687 = vpack.c.b16 %v677, %v676
    %v688 = vpack.c.b16 %v679, %v678
    %v689 = vpack.c.b16 %v681, %v680
    %698 = vmatprep.subr.bf16.mxu0 0
    %699 = vmatpush1.bf16.msra.mxu0 %v682
    %700 = vmatprep.subr.bf16.mxu0 0
    %701 = vmatpush1.bf16.msra.mxu0 %v683
    %702 = vmatprep.subr.bf16.mxu0 0
    %703 = vmatpush1.bf16.msra.mxu0 %v684
    %704 = vmatprep.subr.bf16.mxu0 0
    %705 = vmatpush1.bf16.msra.mxu0 %v685
    %706 = vmatprep.subr.bf16.mxu0 0
    %707 = vmatpush1.bf16.msra.mxu0 %v686
    %708 = vmatprep.subr.bf16.mxu0 0
    %709 = vmatpush1.bf16.msra.mxu0 %v687
    %710 = vmatprep.subr.bf16.mxu0 0
    %711 = vmatpush1.bf16.msra.mxu0 %v688
    %712 = vmatprep.subr.bf16.mxu0 0
    %713 = vmatpush1.bf16.msra.mxu0 %v689
    %714 = vmatprep.subr.bf16.mxu0 0
    %715 = vmatpush1.bf16.msra.mxu0 0
    %716 = vmatprep.subr.bf16.mxu0 0
    %717 = vmatpush1.bf16.msra.mxu0 0
    %718 = vmatprep.subr.bf16.mxu0 0
    %719 = vmatpush1.bf16.msra.mxu0 0
    %720 = vmatprep.subr.bf16.mxu0 0
    %721 = vmatpush1.bf16.msra.mxu0 0
    %722 = vmatprep.subr.bf16.mxu0 0
    %723 = vmatpush1.bf16.msra.mxu0 0
    %724 = vmatprep.subr.bf16.mxu0 0
    %725 = vmatpush1.bf16.msra.mxu0 0
    %726 = vmatprep.subr.bf16.mxu0 0
    %727 = vmatpush1.bf16.msra.mxu0 0
    %728 = vmatprep.subr.bf16.mxu0 0
    %729 = vmatpush1.bf16.msra.mxu0 0
    %730 = vmatprep.mubr.bf16.mxu0 0
    %731 = vmatmul.mubr.bf16.gmra.mrb[0].mxu0 %v626
    %v732 = vpop.f32.mrb[0].mxu0
    %v733 = vadd.f32 %v648, %v732
    %v734 = vpop.f32.mrb[0].mxu0
    %v735 = vpop.f32.mrb[0].mxu0
    %v736 = vpop.f32.mrb[0].mxu0
    %737 = vdwg.mxu0
    %v738 = vmax.f32 %v733, 0.0
    %v739 = vpack.c.bf16 %v738, %v738
    %v740 = vld [vmem:[#allocation10] sm:$0xf]
    %v741 = vld [vmem:[#allocation10 + $0x4] sm:$0xf]
    %v742 = vld [vmem:[#allocation10 + $0x8] sm:$0xf]
    %v743 = vld [vmem:[#allocation10 + $0xc] sm:$0xf]
    %v744 = vld [vmem:[#allocation10 + $0x10] sm:$0xf]
    %v745 = vld [vmem:[#allocation10 + $0x14] sm:$0xf]
    %v746 = vld [vmem:[#allocation10 + $0x18] sm:$0xf]
    %v747 = vld [vmem:[#allocation10 + $0x1c] sm:$0xf]
    %v748 = vld [vmem:[#allocation10 + $0x20] sm:$0xf]
    %v749 = vld [vmem:[#allocation10 + $0x24] sm:$0xf]
    %v750 = vld [vmem:[#allocation10 + $0x28] sm:$0xf]
    %v751 = vld [vmem:[#allocation10 + $0x2c] sm:$0xf]
    %v752 = vld [vmem:[#allocation10 + $0x30] sm:$0xf]
    %v753 = vld [vmem:[#allocation10 + $0x34] sm:$0xf]
    %v754 = vld [vmem:[#allocation10 + $0x38] sm:$0xf]
    %v755 = vld [vmem:[#allocation10 + $0x3c] sm:$0xf]
    %v756 = vld [vmem:[%s13] sm:$0x1]
    %v758 = vlaneseq
    %v759 = vshrl.u32 %v758, 7
    %v760 = vsub.s32 0, %v759
    %v761 = vrot.slane %v756, %v760
    %v779 = vunpack.c.l.b16 %v740
    %v780 = vunpack.c.l.b16 %v741
    %v781 = vunpack.c.l.b16 %v742
    %v782 = vunpack.c.l.b16 %v743
    %v783 = vunpack.c.l.b16 %v744
    %v784 = vunpack.c.l.b16 %v745
    %v785 = vunpack.c.l.b16 %v746
    %v786 = vunpack.c.l.b16 %v747
    %v787 = vunpack.c.l.b16 %v748
    %v788 = vunpack.c.l.b16 %v749
    %v789 = vunpack.c.l.b16 %v750
    %v790 = vunpack.c.l.b16 %v751
    %v791 = vunpack.c.l.b16 %v752
    %v792 = vunpack.c.l.b16 %v753
    %v793 = vunpack.c.l.b16 %v754
    %v794 = vunpack.c.l.b16 %v755
    %v795 = vpack.c.b16 %v780, %v779
    %v796 = vpack.c.b16 %v782, %v781
    %v797 = vpack.c.b16 %v784, %v783
    %v798 = vpack.c.b16 %v786, %v785
    %v799 = vpack.c.b16 %v788, %v787
    %v800 = vpack.c.b16 %v790, %v789
    %v801 = vpack.c.b16 %v792, %v791
    %v802 = vpack.c.b16 %v794, %v793
    %811 = vmatprep.subr.bf16.mxu0 0
    %812 = vmatpush1.bf16.msra.mxu0 %v795
    %813 = vmatprep.subr.bf16.mxu0 0
    %814 = vmatpush1.bf16.msra.mxu0 %v796
    %815 = vmatprep.subr.bf16.mxu0 0
    %816 = vmatpush1.bf16.msra.mxu0 %v797
    %817 = vmatprep.subr.bf16.mxu0 0
    %818 = vmatpush1.bf16.msra.mxu0 %v798
    %819 = vmatprep.subr.bf16.mxu0 0
    %820 = vmatpush1.bf16.msra.mxu0 %v799
    %821 = vmatprep.subr.bf16.mxu0 0
    %822 = vmatpush1.bf16.msra.mxu0 %v800
    %823 = vmatprep.subr.bf16.mxu0 0
    %824 = vmatpush1.bf16.msra.mxu0 %v801
    %825 = vmatprep.subr.bf16.mxu0 0
    %826 = vmatpush1.bf16.msra.mxu0 %v802
    %827 = vmatprep.subr.bf16.mxu0 0
    %828 = vmatpush1.bf16.msra.mxu0 0
    %829 = vmatprep.subr.bf16.mxu0 0
    %830 = vmatpush1.bf16.msra.mxu0 0
    %831 = vmatprep.subr.bf16.mxu0 0
    %832 = vmatpush1.bf16.msra.mxu0 0
    %833 = vmatprep.subr.bf16.mxu0 0
    %834 = vmatpush1.bf16.msra.mxu0 0
    %835 = vmatprep.subr.bf16.mxu0 0
    %836 = vmatpush1.bf16.msra.mxu0 0
    %837 = vmatprep.subr.bf16.mxu0 0
    %838 = vmatpush1.bf16.msra.mxu0 0
    %839 = vmatprep.subr.bf16.mxu0 0
    %840 = vmatpush1.bf16.msra.mxu0 0
    %841 = vmatprep.subr.bf16.mxu0 0
    %842 = vmatpush1.bf16.msra.mxu0 0
    %843 = vmatprep.mubr.bf16.mxu0 0
    %844 = vmatmul.mubr.bf16.gmra.mrb[0].mxu0 %v739
    %v845 = vpop.f32.mrb[0].mxu0
    %v846 = vadd.f32 %v761, %v845
    %v847 = vpop.f32.mrb[0].mxu0
    %v848 = vpop.f32.mrb[0].mxu0
    %v849 = vpop.f32.mrb[0].mxu0
    %850 = vdwg.mxu0
    %v851 = vxor.u32 %v846, 2147483648
    %v852 = vmul.f32 %v851, 1.442695
    %v853 = vpow.pop %v852
    %v854 = vadd.f32 %v853, 1.0
    %v855 = vrcp.pop %v854
    %v856 = vmul.f32 1.0, %v855
    %857 = vst [vmem:[%s14] sm:$0xff] %v856
    %858 = vst [vmem:[%s14 + $0x8] sm:$0xff] %v501
    %859 = vst [vmem:[%s14 + $0x10] sm:$0xff] %v503
    // Predicated region
    $region82: #{vae_forward.1} parent=1 // pred_check
      _
    $region83: #{vae_forward.1} parent=1 // pred_check_branch
      %861 = sbr.rel (0) target = $region85
    $region84: #{vae_forward.1} parent=1 // pred_region
      _
    $region85: #{vae_forward.1} parent=1 // pred_fallthru
      _
    // Predicated region
    $region86: #{vae_forward.1} parent=1 // pred_check
      _
    $region87: #{vae_forward.1} parent=1 // pred_check_branch
      %863 = sbr.rel (0) target = $region89
    $region88: #{vae_forward.1} parent=1 // pred_region
      _
    $region89: #{vae_forward.1} parent=1 // pred_fallthru
      _
    %864 = vsyncpa [#allocation3], 1
    %865 = vsyncpa [#allocation5], 1
    %866 = vsyncpa [#allocation8], 1
    %867 = vsyncpa [#allocation11], 1

</llo_original>
